<compile_context>
chip_gen: v7x
topology: tpu7x:2x2x1
jax: 0.10.0
libtpu: 0.0.40
codegen_flags: <defaults>
</compile_context>

<pallas_src>
import functools

import jax
import jax.numpy as jnp
from jax.experimental import pallas as pl
from jax.experimental.pallas import tpu as pltpu


# ----------------------------- Pallas kernel ------------------------------- #

def _moe_kernel(mask_ref, wsel_ref, x_ref, w_ref, b_ref, coef_ref, out_ref, acc_ref,
                *, n_experts):
    # grid = (token tiles i [parallel], out-feature tiles j [parallel], experts e [arbitrary])
    # mask_ref, wsel_ref : SMEM int32, flattened (n_token_tiles * E,)
    # x_ref   : (tm, D_in)      token tile (resident across j and e -> DMA elided)
    # w_ref   : (1, D_in, tn)   expert weight tile, pre-transposed (no .T in kernel)
    # b_ref   : (E, tn)         all expert biases for this output tile
    # coef_ref: (tm, E)         dense gating coefficients for this token tile
    # out_ref : (tm, tn)        written once at the last expert step
    # acc_ref : (tm, tn) f32    VMEM scratch accumulator
    i = pl.program_id(0)
    e = pl.program_id(2)
    n_e = pl.num_programs(2)

    @pl.when(e == 0)
    def _init():
        acc_ref[...] = jnp.zeros_like(acc_ref)

    @pl.when(mask_ref[i * n_experts + e] != 0)
    def _compute():
        # MXU matmul, f32 accumulation.
        y = jnp.dot(x_ref[...], w_ref[0], preferred_element_type=jnp.float32)
        # Extract gating column e with a masked lane reduction (robust lowering,
        # lands on the XLU slot) instead of a dynamic lane slice.
        coef = coef_ref[...].astype(jnp.float32)                       # (tm, E)
        col = jax.lax.broadcasted_iota(jnp.int32, coef.shape, 1)
        coef_e = jnp.sum(jnp.where(col == e, coef, 0.0), axis=1, keepdims=True)
        acc_ref[...] += coef_e * y

    @pl.when(e == n_e - 1)
    def _finalize():
        # Bias hoisted out of the expert loop: sum_e coef[:,e] * b[e,:] == coef @ b.
        acc_ref[...] += jnp.dot(coef_ref[...], b_ref[...],
                                preferred_element_type=jnp.float32)
        out_ref[...] = acc_ref[...].astype(out_ref.dtype)


# ------------------------------ host helpers ------------------------------- #

def _round_up(x, m):
    return (x + m - 1) // m * m


def _pick_tiles(T, D_out, tm_pref=128):
    tm = min(tm_pref, _round_up(T, 8))
    t_pad = _round_up(T, tm)
    tn = D_out
    for cand in (512, 256, 128):     # prefer large lane-dense output tiles
        if D_out % cand == 0:
            tn = cand
            break
    return tm, t_pad, tn


def _routing_metadata(top_idx, gate_weights, num_experts, tm, t_pad):
    """Dense (T_pad, E) gating coefs + per-(token-tile, expert) routing tables."""
    T, _ = top_idx.shape
    pad = t_pad - T
    n_tiles = t_pad // tm

    one_hot = jax.nn.one_hot(top_idx, num_experts, dtype=jnp.float32)      # (T, K, E)
    coefs = jnp.einsum("tk,tke->te", gate_weights.astype(jnp.float32), one_hot)
    coefs = jnp.pad(coefs, ((0, pad), (0, 0)))                             # (T_pad, E)

    counts = jnp.pad(jnp.sum(one_hot, axis=1), ((0, pad), (0, 0)))         # (T_pad, E)
    tile_mask = (counts.reshape(n_tiles, tm, num_experts).sum(axis=1) > 0.5)
    tile_mask_i32 = tile_mask.astype(jnp.int32)                            # (n_tiles, E)

    # Forward-fill selected expert ids so consecutive skipped steps map to the SAME
    # weight block index -> Pallas elides the weight DMA for those grid steps.
    eidx = jnp.arange(num_experts, dtype=jnp.int32)
    sel_idx = jnp.where(tile_mask, eidx[None, :], -1)
    ffill = jax.lax.cummax(sel_idx, axis=1)
    first = jnp.argmax(tile_mask_i32, axis=1).astype(jnp.int32)            # 0 if none
    w_sel = jnp.where(ffill >= 0, ffill, first[:, None]).astype(jnp.int32)

    return coefs, tile_mask_i32.reshape(-1), w_sel.reshape(-1)


def moe_experts_forward(x, expert_w, expert_b, top_idx, gate_weights, *,
                        compute_dtype=None, tm_pref=128):
    """x: (T, D_in); expert_w: (E, D_out, D_in); expert_b: (E, D_out);
    top_idx: (T, K) int; gate_weights: (T, K)."""
    T, D_in = x.shape
    E, D_out, D_in2 = expert_w.shape
    assert D_in2 == D_in
    out_dtype = x.dtype
    cdt = compute_dtype if compute_dtype is not None else x.dtype

    tm, t_pad, tn = _pick_tiles(T, D_out, tm_pref)
    n_i, n_j = t_pad // tm, D_out // tn

    coefs, tile_mask, w_sel = _routing_metadata(top_idx, gate_weights, E, tm, t_pad)

    x_pad = jnp.pad(x, ((0, t_pad - T), (0, 0))).astype(cdt)      # (T_pad, D_in)
    w_t = jnp.swapaxes(expert_w, 1, 2).astype(cdt)                # (E, D_in, D_out)
    bias = expert_b.astype(cdt)                                   # (E, D_out)
    coefs = coefs.astype(cdt)                                     # (T_pad, E)

    kernel = functools.partial(_moe_kernel, n_experts=E)

    out = pl.pallas_call(
        kernel,
        out_shape=jax.ShapeDtypeStruct((t_pad, D_out), out_dtype),
        grid_spec=pltpu.PrefetchScalarGridSpec(
            num_scalar_prefetch=2,
            grid=(n_i, n_j, E),
            in_specs=[
                # token tile: resident across j and e (same block index -> DMA elided)
                pl.BlockSpec((tm, D_in), lambda i, j, e, m, w: (i, 0)),
                # expert weight tile: scalar-prefetched, forward-filled index
                # (repeated index across skipped steps => weight DMA elided)
                pl.BlockSpec((1, D_in, tn), lambda i, j, e, m, w: (w[i * E + e], 0, j)),
                # all-expert bias slab for this output tile (resident across i and e)
                pl.BlockSpec((E, tn), lambda i, j, e, m, w: (0, j)),
                # dense gating coefficients for this token tile (one DMA per (i, j))
                pl.BlockSpec((tm, E), lambda i, j, e, m, w: (i, 0)),
            ],
            out_specs=pl.BlockSpec((tm, tn), lambda i, j, e, m, w: (i, j)),
            scratch_shapes=[pltpu.VMEM((tm, tn), jnp.float32)],
        ),
        compiler_params=pltpu.CompilerParams(
            # expert (reduction) axis last; token/feature tiles sharded across the
            # two TensorCores on v7x, harmless on v5e/v6e.
            dimension_semantics=("parallel", "parallel", "arbitrary"),
            # explicit budget with headroom vs v7x's 64 MiB physical VMEM.
            vmem_limit_bytes=48 * 1024 * 1024,
        ),
    )(tile_mask, w_sel, x_pad, w_t, bias, coefs)

    return out[:T]


def moe_layer(x, gate_w, gate_b, expert_w, expert_b, num_experts_per_tok, *,
              compute_dtype=None):
    """Full MoeLayer.forward on (..., D) activations (leading dims flattened to tokens,
    matching how mistral_inference invokes the layer)."""
    orig_shape = x.shape
    D = orig_shape[-1]
    xt = x.reshape(-1, D)
    K = num_experts_per_tok

    # Gate + top-k + softmax: tiny O(T*E*D) glue, kept as plain XLA (not the hot path).
    gate_logits = jnp.dot(xt, gate_w.T) + gate_b                       # (T, E)
    top_vals, top_idx = jax.lax.top_k(gate_logits, K)                  # (T, K)
    weights = jax.nn.softmax(top_vals.astype(jnp.float32), axis=-1).astype(x.dtype)

    out = moe_experts_forward(xt, expert_w, expert_b, top_idx, weights,
                              compute_dtype=compute_dtype)
    return out.reshape(orig_shape)


# --------------------------- pure-JAX reference ----------------------------- #

def moe_layer_ref(x, gate_w, gate_b, expert_w, expert_b, K):
    shape = x.shape
    xt = x.reshape(-1, shape[-1])
    logits = xt @ gate_w.T + gate_b
    vals, idx = jax.lax.top_k(logits, K)
    w = jax.nn.softmax(vals.astype(jnp.float32), axis=-1).astype(x.dtype)
    out = jnp.zeros_like(xt)
    for e in range(gate_w.shape[0]):
        y = xt @ expert_w[e].T + expert_b[e]
        coef = jnp.sum(jnp.where(idx == e, w, 0.0), axis=-1, keepdims=True)
        out = out + coef * y
    return out.reshape(shape)


# --------------------------------- main ------------------------------------ #

if __name__ == "__main__":
    B, S, D = 2, 4, 32        # (batch, seq, hidden) -> T = 8 tokens
    E, K = 4, 2               # num_experts, num_experts_per_tok

    key = jax.random.PRNGKey(0)
    kx, kgw, kgb, kew, keb = jax.random.split(key, 5)

    x = jax.random.normal(kx, (B, S, D), dtype=jnp.float32)
    gate_w = jax.random.normal(kgw, (E, D), dtype=jnp.float32) * 0.1        # nn.Linear(D, E)
    gate_b = jax.random.normal(kgb, (E,), dtype=jnp.float32) * 0.1
    expert_w = jax.random.normal(kew, (E, D, D), dtype=jnp.float32) * 0.1   # E x nn.Linear(D, D)
    expert_b = jax.random.normal(keb, (E, D), dtype=jnp.float32) * 0.1

    ref = moe_layer_ref(x, gate_w, gate_b, expert_w, expert_b, K)

    # f32 path (exact-ish vs reference)
    moe_f32 = jax.jit(functools.partial(moe_layer, num_experts_per_tok=K))
    out = jax.block_until_ready(moe_f32(x, gate_w, gate_b, expert_w, expert_b))
    assert out.shape == (B, S, D)
    assert jnp.allclose(out, ref, atol=1e-3, rtol=1e-3), "f32 mismatch vs reference"

    # bf16 MXU-operand path (f32 accumulation in the kernel), looser tolerance
    moe_bf16 = jax.jit(functools.partial(moe_layer, num_experts_per_tok=K,
                                         compute_dtype=jnp.bfloat16))
    out_bf16 = jax.block_until_ready(moe_bf16(x, gate_w, gate_b, expert_w, expert_b))
    assert jnp.allclose(out_bf16, ref, atol=5e-2, rtol=5e-2), "bf16 mismatch vs reference"

    print("KERNEL_OK")
</pallas_src>

<mosaic_0001>
module attributes {stable_mosaic.version = 11 : i64} {
  func.func @_moe_kernel(%arg0: i32, %arg1: i32, %arg2: i32, %arg3: memref<4xi32, #tpu.memory_space<smem>>, %arg4: memref<4xi32, #tpu.memory_space<smem>>, %arg5: memref<8x32xf32, #tpu.memory_space<vmem>>, %arg6: memref<1x32x32xf32, #tpu.memory_space<vmem>>, %arg7: memref<4x32xf32, #tpu.memory_space<vmem>>, %arg8: memref<8x4xf32, #tpu.memory_space<vmem>>, %arg9: memref<8x32xf32, #tpu.memory_space<vmem>>, %arg10: memref<8x32xf32, #tpu.memory_space<vmem>>) attributes {dimension_semantics = [#tpu.dimension_semantics<parallel>, #tpu.dimension_semantics<parallel>, #tpu.dimension_semantics<arbitrary>], iteration_bounds = array<i64: 1, 1, 4>, scalar_prefetch = 2 : i64, scratch_operands = 1 : i64, tpu.core_type = #tpu.core_type<tc>, window_params = [{transform_indices = @transform_0, window_bounds = array<i64: 8, 32>}, {transform_indices = @transform_1, window_bounds = array<i64: 1, 32, 32>}, {transform_indices = @transform_2, window_bounds = array<i64: 4, 32>}, {transform_indices = @transform_3, window_bounds = array<i64: 8, 4>}, {transform_indices = @transform_4, window_bounds = array<i64: 8, 32>}]} {
    %c0_i32 = arith.constant 0 : i32
    %0 = arith.cmpi eq, %arg2, %c0_i32 : i32
    %1 = arith.extui %0 : i1 to i32
    %c0_i32_0 = arith.constant 0 : i32
    %2 = arith.cmpi ne, %1, %c0_i32_0 : i32
    scf.if %2 {
      %cst = arith.constant 0.000000e+00 : f32
      %13 = vector.broadcast %cst : f32 to vector<8x32xf32>
      %c0 = arith.constant 0 : index
      %c0_4 = arith.constant 0 : index
      %14 = vector.load %arg10[%c0, %c0_4] : memref<8x32xf32, #tpu.memory_space<vmem>>, vector<8x32xf32>
      tpu.vector_store %arg10[%c0, %c0_4], %13 {strides = array<i32>} : memref<8x32xf32, #tpu.memory_space<vmem>>, vector<8x32xf32>,
    } else {
    }
    %c4_i32 = arith.constant 4 : i32
    %3 = arith.muli %arg0, %c4_i32 : i32
    %4 = arith.addi %3, %arg2 : i32
    %5 = arith.index_cast %4 : i32 to index
    %6 = memref.load %arg3[%5] : memref<4xi32, #tpu.memory_space<smem>>
    %c0_i32_1 = arith.constant 0 : i32
    %7 = arith.cmpi ne, %6, %c0_i32_1 : i32
    %8 = arith.extui %7 : i1 to i32
    %c0_i32_2 = arith.constant 0 : i32
    %9 = arith.cmpi ne, %8, %c0_i32_2 : i32
    scf.if %9 {
      %c0 = arith.constant 0 : index
      %c0_4 = arith.constant 0 : index
      %13 = vector.load %arg5[%c0, %c0_4] : memref<8x32xf32, #tpu.memory_space<vmem>>, vector<8x32xf32>
      %c0_5 = arith.constant 0 : index
      %c0_6 = arith.constant 0 : index
      %c0_7 = arith.constant 0 : index
      %14 = vector.load %arg6[%c0_5, %c0_6, %c0_7] : memref<1x32x32xf32, #tpu.memory_space<vmem>>, vector<1x32x32xf32>
      %15 = vector.shape_cast %14 : vector<1x32x32xf32> to vector<32x32xf32>
      %cst = arith.constant dense<0.000000e+00> : vector<8x32xf32>
      %16 = tpu.matmul %13, %15, %cst {dimension_numbers = #tpu.dot_dimension_numbers<[1], [0], [0], [1], [0, 0, 1, 1], [], []>} : vector<8x32xf32>, vector<32x32xf32>, vector<8x32xf32> -> vector<8x32xf32>
      %c0_8 = arith.constant 0 : index
      %c0_9 = arith.constant 0 : index
      %17 = vector.load %arg8[%c0_8, %c0_9] : memref<8x4xf32, #tpu.memory_space<vmem>>, vector<8x4xf32>
      %18 = tpu.iota {dimensions = array<i32: 1>} : vector<8x4xi32>
      %19 = vector.broadcast %arg2 : i32 to vector<8x4xi32>
      %20 = arith.cmpi eq, %18, %19 : vector<8x4xi32>
      %cst_10 = arith.constant 0.000000e+00 : f32
      %21 = vector.broadcast %cst_10 : f32 to vector<8x4xf32>
      %22 = arith.select %20, %17, %21 : vector<8x4xi1>, vector<8x4xf32>
      %cst_11 = arith.constant dense<0.000000e+00> : vector<8xf32>
      %23 = vector.multi_reduction <add>, %22, %cst_11 [1] : vector<8x4xf32> to vector<8xf32>
      %24 = vector.shape_cast %23 : vector<8xf32> to vector<8x1xf32>
      %c0_12 = arith.constant 0 : index
      %c0_13 = arith.constant 0 : index
      %25 = vector.load %arg10[%c0_12, %c0_13] : memref<8x32xf32, #tpu.memory_space<vmem>>, vector<8x32xf32>
      %26 = vector.broadcast %24 : vector<8x1xf32> to vector<8x32xf32>
      %27 = arith.mulf %26, %16 : vector<8x32xf32>
      %28 = arith.addf %25, %27 : vector<8x32xf32>
      %c0_14 = arith.constant 0 : index
      %c0_15 = arith.constant 0 : index
      %29 = vector.load %arg10[%c0_14, %c0_15] : memref<8x32xf32, #tpu.memory_space<vmem>>, vector<8x32xf32>
      tpu.vector_store %arg10[%c0_14, %c0_15], %28 {strides = array<i32>} : memref<8x32xf32, #tpu.memory_space<vmem>>, vector<8x32xf32>,
    } else {
    }
    %c3_i32 = arith.constant 3 : i32
    %10 = arith.cmpi eq, %arg2, %c3_i32 : i32
    %11 = arith.extui %10 : i1 to i32
    %c0_i32_3 = arith.constant 0 : i32
    %12 = arith.cmpi ne, %11, %c0_i32_3 : i32
    scf.if %12 {
      %c0 = arith.constant 0 : index
      %c0_4 = arith.constant 0 : index
      %13 = vector.load %arg10[%c0, %c0_4] : memref<8x32xf32, #tpu.memory_space<vmem>>, vector<8x32xf32>
      %c0_5 = arith.constant 0 : index
      %c0_6 = arith.constant 0 : index
      %14 = vector.load %arg8[%c0_5, %c0_6] : memref<8x4xf32, #tpu.memory_space<vmem>>, vector<8x4xf32>
      %c0_7 = arith.constant 0 : index
      %c0_8 = arith.constant 0 : index
      %15 = vector.load %arg7[%c0_7, %c0_8] : memref<4x32xf32, #tpu.memory_space<vmem>>, vector<4x32xf32>
      %cst = arith.constant dense<0.000000e+00> : vector<8x32xf32>
      %16 = tpu.matmul %14, %15, %cst {dimension_numbers = #tpu.dot_dimension_numbers<[1], [0], [0], [1], [0, 0, 1, 1], [], []>} : vector<8x4xf32>, vector<4x32xf32>, vector<8x32xf32> -> vector<8x32xf32>
      %17 = arith.addf %13, %16 : vector<8x32xf32>
      %c0_9 = arith.constant 0 : index
      %c0_10 = arith.constant 0 : index
      %18 = vector.load %arg10[%c0_9, %c0_10] : memref<8x32xf32, #tpu.memory_space<vmem>>, vector<8x32xf32>
      tpu.vector_store %arg10[%c0_9, %c0_10], %17 {strides = array<i32>} : memref<8x32xf32, #tpu.memory_space<vmem>>, vector<8x32xf32>,
      %c0_11 = arith.constant 0 : index
      %c0_12 = arith.constant 0 : index
      %19 = vector.load %arg10[%c0_11, %c0_12] : memref<8x32xf32, #tpu.memory_space<vmem>>, vector<8x32xf32>
      %c0_13 = arith.constant 0 : index
      %c0_14 = arith.constant 0 : index
      %20 = vector.load %arg9[%c0_13, %c0_14] : memref<8x32xf32, #tpu.memory_space<vmem>>, vector<8x32xf32>
      tpu.vector_store %arg9[%c0_13, %c0_14], %19 {strides = array<i32>} : memref<8x32xf32, #tpu.memory_space<vmem>>, vector<8x32xf32>,
    } else {
    }
    return
  }
  func.func @transform_0(%arg0: i32, %arg1: i32, %arg2: i32, %arg3: memref<4xi32, #tpu.memory_space<smem>>, %arg4: memref<4xi32, #tpu.memory_space<smem>>) -> (i32, i32) {
    %c0_i32 = arith.constant 0 : i32
    %c0_i32_0 = arith.constant 0 : i32
    return %arg0, %c0_i32 : i32, i32
  }
  func.func @transform_1(%arg0: i32, %arg1: i32, %arg2: i32, %arg3: memref<4xi32, #tpu.memory_space<smem>>, %arg4: memref<4xi32, #tpu.memory_space<smem>>) -> (i32, i32, i32) {
    %c4_i32 = arith.constant 4 : i32
    %0 = arith.muli %arg0, %c4_i32 : i32
    %1 = arith.addi %0, %arg2 : i32
    %2 = arith.index_cast %1 : i32 to index
    %3 = memref.load %arg4[%2] : memref<4xi32, #tpu.memory_space<smem>>
    %c0_i32 = arith.constant 0 : i32
    %c0_i32_0 = arith.constant 0 : i32
    return %3, %c0_i32, %arg1 : i32, i32, i32
  }
  func.func @transform_2(%arg0: i32, %arg1: i32, %arg2: i32, %arg3: memref<4xi32, #tpu.memory_space<smem>>, %arg4: memref<4xi32, #tpu.memory_space<smem>>) -> (i32, i32) {
    %c0_i32 = arith.constant 0 : i32
    %c0_i32_0 = arith.constant 0 : i32
    return %c0_i32, %arg1 : i32, i32
  }
  func.func @transform_3(%arg0: i32, %arg1: i32, %arg2: i32, %arg3: memref<4xi32, #tpu.memory_space<smem>>, %arg4: memref<4xi32, #tpu.memory_space<smem>>) -> (i32, i32) {
    %c0_i32 = arith.constant 0 : i32
    %c0_i32_0 = arith.constant 0 : i32
    return %arg0, %c0_i32 : i32, i32
  }
  func.func @transform_4(%arg0: i32, %arg1: i32, %arg2: i32, %arg3: memref<4xi32, #tpu.memory_space<smem>>, %arg4: memref<4xi32, #tpu.memory_space<smem>>) -> (i32, i32) {
    %c0_i32 = arith.constant 0 : i32
    return %arg0, %arg1 : i32, i32
  }
}

</mosaic_0001>

<llo_original>
// kernel: moe_layer.1
$region0: #{moe_layer.1}
  #allocation0 [shape = 'u32[]', space=smem, size = 0x4, offset = 0x4, fixed_abs, tag = 'smem constant byte address 0x4 - core index']
  #allocation1 [shape = 'u32[144,128]{1,0:T(1,128)}', space=vmem, size = 0x12000, scoped, tag = 'internal scratch']
  #allocation2 [shape = 'f32[8,32]{1,0:T(8,128)}', space=vmem, size = 0x1000, scoped, tag = 'scratch operand']
  #allocation3 [shape = 's32[1]{0}', space=sflag, size = 0x4, scoped, tag = 'scoped memory for moe_layer.1']
  #allocation4 [shape = 'u8[512]{0}', space=smem, size = 0x200, scoped, tag = 'prefetched SMEM operand 0']
  #allocation5 [shape = 'u8[512]{0}', space=smem, size = 0x200, scoped, tag = 'prefetched SMEM operand 1']
  %s0 = inlined_call_operand.vmem [shape: s32[4], index: 0, kind: input, shape index: {}]
  %s1 = inlined_call_operand.vmem [shape: s32[4], index: 1, kind: input, shape index: {}]
  %s2 = inlined_call_operand.vmem [shape: f32[8,32], index: 2, kind: input, shape index: {}]
  %s3 = inlined_call_operand.vmem [shape: f32[4,32,32], index: 3, kind: input, shape index: {}]
  %s4 = inlined_call_operand.vmem [shape: f32[4,32], index: 4, kind: input, shape index: {}]
  %s5 = inlined_call_operand.vmem [shape: f32[8,4], index: 5, kind: input, shape index: {}]
  %s6 = inlined_call_operand.hbm [shape: f32[8,32], index: 6, kind: output, shape index: {}]
  %s7 = sld [smem:[#allocation0]]
  $region61: #{moe_layer.1} parent=0
    _
  %s9 = ssub.s32 1, %s7
  %s10 = scalar_select 0, %s9, %s7
  %s11 = sshll.u32 %s0, 4
  %s12 = int_to_ptr.vmem [resolvable:$true] %s11
  %14 = dma.vmem_to_smem %s12, 16, [#allocation4], [#allocation3]
  %s15 = sshll.u32 %s1, 4
  %s16 = int_to_ptr.vmem [resolvable:$true] %s15
  %18 = dma.vmem_to_smem %s16, 16, [#allocation5], [#allocation3]
  %19 = dma.done [#allocation3], 32
  %20 = sfence
  $region1: #{moe_layer.1} parent=0
    #allocation6 [shape = 'u8[4096]{0}', space=vmem, size = 0x1000, scoped, tag = 'output window, operand 0, single buffered']
    #allocation7 [shape = 's32[2]{0}', space=sflag, size = 0x8, scoped, tag = 'scoped memory for moe_layer.1']
    %21 = vsyncpa [#allocation7], 0
    loop: start=0, step=1, limit=6
    $region2: #{moe_layer.1} parent=1 // loop_pre_header
      _
    $region3: #{moe_layer.1} parent=1 // loop_header
      %s23 = sphi 0, %s27
      %p24 = scmp.ge.s32.totalorder %s23, 6
      %s30 = sphi 0, %s49
      %s31 = sphi 0, %s45
      %s32 = sphi 0, %s41
      %s33 = sphi 0, %s30
      %s34 = sphi 0, %s31
      %s35 = sphi 0, %s32
      %s36 = sphi 0, %s33
      %s37 = sphi 0, %s34
      %s38 = sphi 0, %s35
      %s52 = sphi 0, %s54
      %s55 = sphi 0, %s52
      %s56 = sphi 0, %s55
      %s72 = sphi 0, %s56
      %s86 = sphi 0, %s88
      %s89 = sphi 0, %s86
      %s90 = sphi 0, %s89
      %s106 = sphi 0, %s90
      %s112 = sphi 0, %s114
      %s115 = sphi 0, %s112
      %s116 = sphi 0, %s115
      %s132 = sphi 0, %s116
      %s138 = sphi 0, %s140
      %s141 = sphi 0, %s138
      %s142 = sphi 0, %s141
      %s158 = sphi 0, %s142
      %s166 = sphi 0, %s168
      %s169 = sphi 0, %s166
      %s170 = sphi 0, %s169
      %s186 = sphi 0, %s170
    $region4: #{moe_layer.1} parent=1 // loop_header_branch
      %26 = sbr.rel (%p24) target = $region8
    $region5: #{moe_layer.1} parent=1 // loop_body
      %s28 = ssub.s32 %s23, 1
      %s29 = ssub.s32 %s23, 2
      %s39 = sadd.s32 1, %s32
      %p40 = scmp.ge.s32.totalorder %s39, 4
      %s41 = scalar_select %p40, 0, %s39
      %s42 = sadd.s32 1, %s31
      %s43 = scalar_select %p40, %s42, %s31
      %p44 = scmp.ge.s32.totalorder %s43, 1
      %s45 = scalar_select %p44, 0, %s43
      %s46 = sadd.s32 1, %s30
      %s47 = scalar_select %p44, %s46, %s30
      %p48 = scmp.ge.s32.totalorder %s47, 1
      %s49 = scalar_select %p48, 0, %s47
      %s50 = ssub.s32 %s30, %s49
      %p51 = scmp.eq.s32.totalorder %s50, 0
      %s53 = sadd.s32 %s52, 1
      %s54 = scalar_select %p51, %s52, %s53
      %p57 = pneg %p51
      %p58 = scmp.eq.s32.totalorder %s23, 3
      %p59 = por %p57, %p58
      %p60 = scmp.ne.s32.totalorder %s52, %s55
      %p61 = scmp.eq.s32.totalorder %s23, 0
      %p62 = por %p60, %p61
      %p63 = scmp.ne.s32.totalorder %s52, %s55
      %p64 = scmp.eq.s32.totalorder %s28, 3
      %p65 = por %p63, %p64
      %p66 = scmp.ne.s32.totalorder %s55, %s56
      %p67 = scmp.eq.s32.totalorder %s28, 0
      %p68 = por %p66, %p67
      %p69 = scmp.ne.s32.totalorder %s55, %s56
      %p70 = scmp.eq.s32.totalorder %s29, 3
      %p71 = por %p69, %p70
      %p73 = scmp.ne.s32.totalorder %s56, %s72
      %p74 = scmp.eq.s32.totalorder %s29, 0
      %p75 = por %p73, %p74
      %s76 = smul.u32 %s30, 4
      %s77 = sadd.s32 %s76, %s32
      %s78 = sld [smem:[#allocation5 + %s77]]
      %s79 = smul.u32 %s49, 4
      %s80 = sadd.s32 %s79, %s41
      %s81 = sld [smem:[#allocation5 + %s80]]
      %s82 = ssub.s32 %s78, %s81
      %s83 = ssub.s32 %s31, %s45
      %s84 = sor.u32 %s82, %s83
      %p85 = scmp.eq.s32.totalorder %s84, 0
      %s87 = sadd.s32 %s86, 1
      %s88 = scalar_select %p85, %s86, %s87
      %p91 = pneg %p85
      %p92 = scmp.eq.s32.totalorder %s23, 3
      %p93 = por %p91, %p92
      %p94 = scmp.ne.s32.totalorder %s86, %s89
      %p95 = scmp.eq.s32.totalorder %s23, 0
      %p96 = por %p94, %p95
      %p97 = scmp.ne.s32.totalorder %s86, %s89
      %p98 = scmp.eq.s32.totalorder %s28, 3
      %p99 = por %p97, %p98
      %p100 = scmp.ne.s32.totalorder %s89, %s90
      %p101 = scmp.eq.s32.totalorder %s28, 0
      %p102 = por %p100, %p101
      %p103 = scmp.ne.s32.totalorder %s89, %s90
      %p104 = scmp.eq.s32.totalorder %s29, 3
      %p105 = por %p103, %p104
      %p107 = scmp.ne.s32.totalorder %s90, %s106
      %p108 = scmp.eq.s32.totalorder %s29, 0
      %p109 = por %p107, %p108
      %s110 = ssub.s32 %s31, %s45
      %p111 = scmp.eq.s32.totalorder %s110, 0
      %s113 = sadd.s32 %s112, 1
      %s114 = scalar_select %p111, %s112, %s113
      %p117 = pneg %p111
      %p118 = scmp.eq.s32.totalorder %s23, 3
      %p119 = por %p117, %p118
      %p120 = scmp.ne.s32.totalorder %s112, %s115
      %p121 = scmp.eq.s32.totalorder %s23, 0
      %p122 = por %p120, %p121
      %p123 = scmp.ne.s32.totalorder %s112, %s115
      %p124 = scmp.eq.s32.totalorder %s28, 3
      %p125 = por %p123, %p124
      %p126 = scmp.ne.s32.totalorder %s115, %s116
      %p127 = scmp.eq.s32.totalorder %s28, 0
      %p128 = por %p126, %p127
      %p129 = scmp.ne.s32.totalorder %s115, %s116
      %p130 = scmp.eq.s32.totalorder %s29, 3
      %p131 = por %p129, %p130
      %p133 = scmp.ne.s32.totalorder %s116, %s132
      %p134 = scmp.eq.s32.totalorder %s29, 0
      %p135 = por %p133, %p134
      %s136 = ssub.s32 %s30, %s49
      %p137 = scmp.eq.s32.totalorder %s136, 0
      %s139 = sadd.s32 %s138, 1
      %s140 = scalar_select %p137, %s138, %s139
      %p143 = pneg %p137
      %p144 = scmp.eq.s32.totalorder %s23, 3
      %p145 = por %p143, %p144
      %p146 = scmp.ne.s32.totalorder %s138, %s141
      %p147 = scmp.eq.s32.totalorder %s23, 0
      %p148 = por %p146, %p147
      %p149 = scmp.ne.s32.totalorder %s138, %s141
      %p150 = scmp.eq.s32.totalorder %s28, 3
      %p151 = por %p149, %p150
      %p152 = scmp.ne.s32.totalorder %s141, %s142
      %p153 = scmp.eq.s32.totalorder %s28, 0
      %p154 = por %p152, %p153
      %p155 = scmp.ne.s32.totalorder %s141, %s142
      %p156 = scmp.eq.s32.totalorder %s29, 3
      %p157 = por %p155, %p156
      %p159 = scmp.ne.s32.totalorder %s142, %s158
      %p160 = scmp.eq.s32.totalorder %s29, 0
      %p161 = por %p159, %p160
      %s162 = ssub.s32 %s30, %s49
      %s163 = ssub.s32 %s31, %s45
      %s164 = sor.u32 %s162, %s163
      %p165 = scmp.eq.s32.totalorder %s164, 0
      %s167 = sadd.s32 %s166, 1
      %s168 = scalar_select %p165, %s166, %s167
      %p171 = pneg %p165
      %p172 = scmp.eq.s32.totalorder %s23, 3
      %p173 = por %p171, %p172
      %p174 = scmp.ne.s32.totalorder %s166, %s169
      %p175 = scmp.eq.s32.totalorder %s23, 0
      %p176 = por %p174, %p175
      %p177 = scmp.ne.s32.totalorder %s166, %s169
      %p178 = scmp.eq.s32.totalorder %s28, 3
      %p179 = por %p177, %p178
      %p180 = scmp.ne.s32.totalorder %s169, %s170
      %p181 = scmp.eq.s32.totalorder %s28, 0
      %p182 = por %p180, %p181
      %p183 = scmp.ne.s32.totalorder %s169, %s170
      %p184 = scmp.eq.s32.totalorder %s29, 3
      %p185 = por %p183, %p184
      %p187 = scmp.ne.s32.totalorder %s170, %s186
      %p188 = scmp.eq.s32.totalorder %s29, 0
      %p189 = por %p187, %p188
      %p190 = scmp.le.s32.totalorder 1, %s23
      %p191 = scmp.lt.s32.totalorder %s23, 5
      %p192 = pnand %p190, %p191
      %p193 = pneg %p192
      // Predicated region
      $region9: #{moe_layer.1} parent=5 // pred_check
        _
      $region10: #{moe_layer.1} parent=5 // pred_check_branch
        %195 = sbr.rel (%p192) target = $region12
      $region11: #{moe_layer.1} parent=5 // pred_region
        %s196 = ssub.s32 %s23, 1
        // Predicated region
        $region13: #{moe_layer.1} parent=11 // pred_check
          %p197 = pneg %p68
        $region14: #{moe_layer.1} parent=11 // pred_check_branch
          %199 = sbr.rel (%p197) target = $region16
        $region15: #{moe_layer.1} parent=11 // pred_region
          %p200 = scmp.lt.s32.totalorder %s33, 0
          %s201 = scalar_select %p200, %s33, 0
          %s202 = smul.addr %s201, 8
          %s203 = scalar_lea.vmem %s2, %s202
        $region16: #{moe_layer.1} parent=11 // pred_fallthru
          _
        // Predicated region
        $region17: #{moe_layer.1} parent=11 // pred_check
          %p204 = pneg %p128
        $region18: #{moe_layer.1} parent=11 // pred_check_branch
          %206 = sbr.rel (%p204) target = $region20
        $region19: #{moe_layer.1} parent=11 // pred_region
          %p207 = scmp.lt.s32.totalorder %s34, 0
          %s208 = scalar_select %p207, %s34, 0
          %s209 = smul.addr %s208, 4
          %s210 = scalar_lea.vmem %s4, %s209
        $region20: #{moe_layer.1} parent=11 // pred_fallthru
          _
        // Predicated region
        $region21: #{moe_layer.1} parent=11 // pred_check
          %p211 = pneg %p154
        $region22: #{moe_layer.1} parent=11 // pred_check_branch
          %213 = sbr.rel (%p211) target = $region24
        $region23: #{moe_layer.1} parent=11 // pred_region
          %p214 = scmp.lt.s32.totalorder %s33, 0
          %s215 = scalar_select %p214, %s33, 0
          %s216 = smul.addr %s215, 8
          %s217 = scalar_lea.vmem %s5, %s216
        $region24: #{moe_layer.1} parent=11 // pred_fallthru
          _
      $region12: #{moe_layer.1} parent=5 // pred_fallthru
        _
      %p218 = scmp.lt.s32.totalorder %s23, 4
      // Predicated region
      $region25: #{moe_layer.1} parent=5 // pred_check
        %p219 = pneg %p218
      $region26: #{moe_layer.1} parent=5 // pred_check_branch
        %221 = sbr.rel (%p219) target = $region28
      $region27: #{moe_layer.1} parent=5 // pred_region
        // Predicated region
        $region29: #{moe_layer.1} parent=27 // pred_check
          %p222 = pneg %p96
        $region30: #{moe_layer.1} parent=27 // pred_check_branch
          %224 = sbr.rel (%p222) target = $region32
        $region31: #{moe_layer.1} parent=27 // pred_region
          %s225 = smul.u32 %s30, 4
          %s226 = sadd.s32 %s225, %s32
          %s227 = sld [smem:[#allocation5 + %s226]]
          %p228 = scmp.lt.s32.totalorder %s227, 3
          %s229 = scalar_select %p228, %s227, 3
          %p230 = scmp.lt.s32.totalorder %s31, 0
          %s231 = scalar_select %p230, %s31, 0
          %s232 = smul.addr %s229, 4
          %s233 = sadd.s32 %s231, %s232
          %s234 = smul.addr %s233, 8
          %s235 = scalar_lea.vmem %s3, %s234
          %s236 = smul.u32 %s30, 4
          %s237 = sadd.s32 %s236, %s32
          %s238 = sld [smem:[#allocation5 + %s237]]
        $region32: #{moe_layer.1} parent=27 // pred_fallthru
          _
      $region28: #{moe_layer.1} parent=5 // pred_fallthru
        _
      %p239 = scmp.le.s32.totalorder 1, %s23
      %p240 = scmp.lt.s32.totalorder %s23, 5
      %p241 = pnand %p239, %p240
      %p242 = pneg %p241
      // Predicated region
      $region33: #{moe_layer.1} parent=5 // pred_check
        _
      $region34: #{moe_layer.1} parent=5 // pred_check_branch
        %244 = sbr.rel (%p241) target = $region36
      $region35: #{moe_layer.1} parent=5 // pred_region
        %s245 = ssub.s32 %s23, 1
        %p246 = scmp.lt.s32.totalorder %s33, 0
        %s247 = scalar_select %p246, %s33, 0
        %s248 = smul.addr %s247, 8
        %s249 = scalar_lea.vmem %s2, %s248
        %p250 = pneg %p68
        %p251 = pneg %p65
        %s252 = smul.u32 %s33, 4
        %s253 = sadd.s32 %s252, %s35
        %s254 = sld [smem:[#allocation5 + %s253]]
        %p255 = scmp.lt.s32.totalorder %s254, 3
        %s256 = scalar_select %p255, %s254, 3
        %p257 = scmp.lt.s32.totalorder %s34, 0
        %s258 = scalar_select %p257, %s34, 0
        %s259 = smul.addr %s256, 4
        %s260 = sadd.s32 %s258, %s259
        %s261 = smul.addr %s260, 8
        %s262 = scalar_lea.vmem %s3, %s261
        %p263 = pneg %p102
        %p264 = pneg %p99
        %p265 = scmp.lt.s32.totalorder %s34, 0
        %s266 = scalar_select %p265, %s34, 0
        %s267 = smul.addr %s266, 4
        %s268 = scalar_lea.vmem %s4, %s267
        %p269 = pneg %p128
        %p270 = pneg %p125
        %p271 = scmp.lt.s32.totalorder %s33, 0
        %s272 = scalar_select %p271, %s33, 0
        %s273 = smul.addr %s272, 8
        %s274 = scalar_lea.vmem %s5, %s273
        %p275 = pneg %p154
        %p276 = pneg %p151
        %p277 = pneg %p182
        %p278 = pneg %p179
        %p279 = scmp.lt.s32.totalorder %s33, 0
        %s280 = scalar_select %p279, %s33, 0
        %s281 = smul.addr %s280, 8
        %s282 = scalar_lea.vmem %s2, %s281
        %s283 = smul.u32 %s33, 4
        %s284 = sadd.s32 %s283, %s35
        %s285 = sld [smem:[#allocation5 + %s284]]
        %p286 = scmp.lt.s32.totalorder %s285, 3
        %s287 = scalar_select %p286, %s285, 3
        %p288 = scmp.lt.s32.totalorder %s34, 0
        %s289 = scalar_select %p288, %s34, 0
        %s290 = smul.addr %s287, 4
        %s291 = sadd.s32 %s289, %s290
        %s292 = smul.addr %s291, 8
        %s293 = scalar_lea.vmem %s3, %s292
        %s294 = smul.u32 %s33, 4
        %s295 = sadd.s32 %s294, %s35
        %s296 = sld [smem:[#allocation5 + %s295]]
        %p297 = scmp.lt.s32.totalorder %s34, 0
        %s298 = scalar_select %p297, %s34, 0
        %s299 = smul.addr %s298, 4
        %s300 = scalar_lea.vmem %s4, %s299
        %p301 = scmp.lt.s32.totalorder %s33, 0
        %s302 = scalar_select %p301, %s33, 0
        %s303 = smul.addr %s302, 8
        %s304 = scalar_lea.vmem %s5, %s303
        %p305 = scmp.eq.s32.totalorder %s35, 0
        // Predicated region
        $region37: #{moe_layer.1} parent=35 // pred_check
          %p306 = pneg %p305
        $region38: #{moe_layer.1} parent=35 // pred_check_branch
          %308 = sbr.rel (%p306) target = $region40
        $region39: #{moe_layer.1} parent=35 // pred_region
          %vm309 = vcmask 261120
          %310 = vst.msk [vmem:[#allocation2] sm:$0xff] %vm309, 0.0
        $region40: #{moe_layer.1} parent=35 // pred_fallthru
          _
        %s311 = smul.u32 %s33, 4
        %s312 = sadd.s32 %s311, %s35
        %s313 = sld [smem:[#allocation4 + %s312]]
        %p314 = scmp.ne.s32.totalorder %s313, 0
        // Predicated region
        $region41: #{moe_layer.1} parent=35 // pred_check
          %p315 = pneg %p314
        $region42: #{moe_layer.1} parent=35 // pred_check_branch
          %317 = sbr.rel (%p315) target = $region44
        $region43: #{moe_layer.1} parent=35 // pred_region
          %v318 = vld [vmem:[%s282] sm:$0xff]
          %v319 = vld [vmem:[%s293] sm:$0xff]
          %v320 = vld [vmem:[%s293 + $0x8] sm:$0xff]
          %v321 = vld [vmem:[%s293 + $0x10] sm:$0xff]
          %v322 = vld [vmem:[%s293 + $0x18] sm:$0xff]
          %vm323 = vcmask 261120
          %v325 = vsel %vm323, %v318, 0
          %327 = vmatprep.subr.mxu0 0.0
          %328 = vmatpush1.msra.mxu0 %v319
          %329 = vmatprep.subr.mxu0 0.0
          %330 = vmatpush1.msra.mxu0 %v320
          %331 = vmatprep.subr.mxu0 0.0
          %332 = vmatpush1.msra.mxu0 %v321
          %333 = vmatprep.subr.mxu0 0.0
          %334 = vmatpush1.msra.mxu0 %v322
          %335 = vmatprep.subr.mxu0 0.0
          %336 = vmatpush1.msra.mxu0 0.0
          %337 = vmatprep.subr.mxu0 0.0
          %338 = vmatpush1.msra.mxu0 0.0
          %339 = vmatprep.subr.mxu0 0.0
          %340 = vmatpush1.msra.mxu0 0.0
          %341 = vmatprep.subr.mxu0 0.0
          %342 = vmatpush1.msra.mxu0 0.0
          %343 = vmatprep.subr.mxu0 0.0
          %344 = vmatpush1.msra.mxu0 0.0
          %345 = vmatprep.subr.mxu0 0.0
          %346 = vmatpush1.msra.mxu0 0.0
          %347 = vmatprep.subr.mxu0 0.0
          %348 = vmatpush1.msra.mxu0 0.0
          %349 = vmatprep.subr.mxu0 0.0
          %350 = vmatpush1.msra.mxu0 0.0
          %351 = vmatprep.subr.mxu0 0.0
          %352 = vmatpush1.msra.mxu0 0.0
          %353 = vmatprep.subr.mxu0 0.0
          %354 = vmatpush1.msra.mxu0 0.0
          %355 = vmatprep.subr.mxu0 0.0
          %356 = vmatpush1.msra.mxu0 0.0
          %357 = vmatprep.subr.mxu0 0.0
          %358 = vmatpush1.msra.mxu0 0.0
          %359 = vmatprep.subr.mxu0 0.0
          %360 = vmatpush1.msra.mxu0 0.0
          %361 = vmatprep.subr.mxu0 0.0
          %362 = vmatpush1.msra.mxu0 0.0
          %363 = vmatprep.subr.mxu0 0.0
          %364 = vmatpush1.msra.mxu0 0.0
          %365 = vmatprep.subr.mxu0 0.0
          %366 = vmatpush1.msra.mxu0 0.0
          %367 = vmatprep.subr.mxu0 0.0
          %368 = vmatpush1.msra.mxu0 0.0
          %369 = vmatprep.subr.mxu0 0.0
          %370 = vmatpush1.msra.mxu0 0.0
          %371 = vmatprep.subr.mxu0 0.0
          %372 = vmatpush1.msra.mxu0 0.0
          %373 = vmatprep.subr.mxu0 0.0
          %374 = vmatpush1.msra.mxu0 0.0
          %375 = vmatprep.subr.mxu0 0.0
          %376 = vmatpush1.msra.mxu0 0.0
          %377 = vmatprep.subr.mxu0 0.0
          %378 = vmatpush1.msra.mxu0 0.0
          %379 = vmatprep.subr.mxu0 0.0
          %380 = vmatpush1.msra.mxu0 0.0
          %381 = vmatprep.subr.mxu0 0.0
          %382 = vmatpush1.msra.mxu0 0.0
          %383 = vmatprep.subr.mxu0 0.0
          %384 = vmatpush1.msra.mxu0 0.0
          %385 = vmatprep.subr.mxu0 0.0
          %386 = vmatpush1.msra.mxu0 0.0
          %387 = vmatprep.subr.mxu0 0.0
          %388 = vmatpush1.msra.mxu0 0.0
          %389 = vmatprep.subr.mxu0 0.0
          %390 = vmatpush1.msra.mxu0 0.0
          %391 = vmatprep.mubr.f32.mxu0 0.0
          %392 = vmatmul.mubr.f32.gmra.mrb[0].mxu0 %v325
          %v393 = vpop.f32.mrb[0].mxu0
          %v394 = vadd.f32 0.0, %v393
          %v395 = vpop.f32.mrb[0].mxu0
          %396 = vdwg.mxu0
          %v397 = vld [vmem:[%s304] sm:$0xff]
          %v398 = vlaneseq
          %v399 = vand.u32 %v398, 127
          %v400 = vstv %s35
          %vm401 = vcmp.eq.s32.totalorder %v399, %v400
          %v402 = vsel %vm401, %v397, 0.0
          %vm403 = vcmask 31744
          %v404 = vsel %vm403, %v402, 0.0
          %405 = vadd.xlane.f32.xlu0 %v404
          %v406 = vpop.xlane.xlu0 %405
          %v407 = vld [vmem:[#allocation2] sm:$0xff]
          %v408 = vmul.f32 %v406, %v394
          %v409 = vadd.f32 %v407, %v408
          %410 = vst.msk [vmem:[#allocation2] sm:$0xff] %vm323, %v409
        $region44: #{moe_layer.1} parent=35 // pred_fallthru
          _
        %p411 = scmp.eq.s32.totalorder %s35, 3
        // Predicated region
        $region45: #{moe_layer.1} parent=35 // pred_check
          %p412 = pneg %p411
        $region46: #{moe_layer.1} parent=35 // pred_check_branch
          %414 = sbr.rel (%p412) target = $region48
        $region47: #{moe_layer.1} parent=35 // pred_region
          %v415 = vld [vmem:[#allocation2] sm:$0xff]
          %v416 = vld [vmem:[%s304] sm:$0xff]
          %v417 = vld [vmem:[%s300] sm:$0xf]
          %vm418 = vcmask 31744
          %v420 = vsel %vm418, %v416, 0
          %vm422 = vcmask 1043456
          %v424 = vsel %vm422, %v417, 0
          %426 = vmatprep.subr.mxu0 0.0
          %427 = vmatpush1.msra.mxu0 %v424
          %428 = vmatprep.subr.mxu0 0.0
          %429 = vmatpush1.msra.mxu0 0.0
          %430 = vmatprep.subr.mxu0 0.0
          %431 = vmatpush1.msra.mxu0 0.0
          %432 = vmatprep.subr.mxu0 0.0
          %433 = vmatpush1.msra.mxu0 0.0
          %434 = vmatprep.subr.mxu0 0.0
          %435 = vmatpush1.msra.mxu0 0.0
          %436 = vmatprep.subr.mxu0 0.0
          %437 = vmatpush1.msra.mxu0 0.0
          %438 = vmatprep.subr.mxu0 0.0
          %439 = vmatpush1.msra.mxu0 0.0
          %440 = vmatprep.subr.mxu0 0.0
          %441 = vmatpush1.msra.mxu0 0.0
          %442 = vmatprep.subr.mxu0 0.0
          %443 = vmatpush1.msra.mxu0 0.0
          %444 = vmatprep.subr.mxu0 0.0
          %445 = vmatpush1.msra.mxu0 0.0
          %446 = vmatprep.subr.mxu0 0.0
          %447 = vmatpush1.msra.mxu0 0.0
          %448 = vmatprep.subr.mxu0 0.0
          %449 = vmatpush1.msra.mxu0 0.0
          %450 = vmatprep.subr.mxu0 0.0
          %451 = vmatpush1.msra.mxu0 0.0
          %452 = vmatprep.subr.mxu0 0.0
          %453 = vmatpush1.msra.mxu0 0.0
          %454 = vmatprep.subr.mxu0 0.0
          %455 = vmatpush1.msra.mxu0 0.0
          %456 = vmatprep.subr.mxu0 0.0
          %457 = vmatpush1.msra.mxu0 0.0
          %458 = vmatprep.subr.mxu0 0.0
          %459 = vmatpush1.msra.mxu0 0.0
          %460 = vmatprep.subr.mxu0 0.0
          %461 = vmatpush1.msra.mxu0 0.0
          %462 = vmatprep.subr.mxu0 0.0
          %463 = vmatpush1.msra.mxu0 0.0
          %464 = vmatprep.subr.mxu0 0.0
          %465 = vmatpush1.msra.mxu0 0.0
          %466 = vmatprep.subr.mxu0 0.0
          %467 = vmatpush1.msra.mxu0 0.0
          %468 = vmatprep.subr.mxu0 0.0
          %469 = vmatpush1.msra.mxu0 0.0
          %470 = vmatprep.subr.mxu0 0.0
          %471 = vmatpush1.msra.mxu0 0.0
          %472 = vmatprep.subr.mxu0 0.0
          %473 = vmatpush1.msra.mxu0 0.0
          %474 = vmatprep.subr.mxu0 0.0
          %475 = vmatpush1.msra.mxu0 0.0
          %476 = vmatprep.subr.mxu0 0.0
          %477 = vmatpush1.msra.mxu0 0.0
          %478 = vmatprep.subr.mxu0 0.0
          %479 = vmatpush1.msra.mxu0 0.0
          %480 = vmatprep.subr.mxu0 0.0
          %481 = vmatpush1.msra.mxu0 0.0
          %482 = vmatprep.subr.mxu0 0.0
          %483 = vmatpush1.msra.mxu0 0.0
          %484 = vmatprep.subr.mxu0 0.0
          %485 = vmatpush1.msra.mxu0 0.0
          %486 = vmatprep.subr.mxu0 0.0
          %487 = vmatpush1.msra.mxu0 0.0
          %488 = vmatprep.subr.mxu0 0.0
          %489 = vmatpush1.msra.mxu0 0.0
          %490 = vmatprep.mubr.f32.mxu0 0.0
          %491 = vmatmul.mubr.f32.gmra.mrb[0].mxu0 %v420
          %v492 = vpop.f32.mrb[0].mxu0
          %v493 = vadd.f32 0.0, %v492
          %v494 = vpop.f32.mrb[0].mxu0
          %495 = vdwg.mxu0
          %v496 = vadd.f32 %v415, %v493
          %vm497 = vcmask 261120
          %498 = vst.msk [vmem:[#allocation2] sm:$0xff] %vm497, %v496
          %v499 = vld [vmem:[#allocation2] sm:$0xff]
          %500 = vst.msk [vmem:[#allocation6] sm:$0xff] %vm497, %v499
        $region48: #{moe_layer.1} parent=35 // pred_fallthru
          _
        // Predicated region
        $region49: #{moe_layer.1} parent=35 // pred_check
          %p501 = pneg %p179
        $region50: #{moe_layer.1} parent=35 // pred_check_branch
          %503 = sbr.rel (%p501) target = $region52
        $region51: #{moe_layer.1} parent=35 // pred_region
          %s505 = ssub.s32 128, 128
          %506 = vsyncadd [#allocation7], %s505
          %s507 = sadd.s32 %s34, %s33
          %s508 = smul.addr %s507, 128
          %s509 = scalar_lea.hbm %s6, %s508
          %s511 = sshll.u32 [#allocation6], 4
          %s512 = int_to_ptr.vmem [resolvable:$true] %s511
          %514 = dma.vmem_to_hbm [thread:$0]  %s512, 128, %s509, [#allocation7]
        $region52: #{moe_layer.1} parent=35 // pred_fallthru
          _
        // Predicated region
        $region53: #{moe_layer.1} parent=35 // pred_check
          %p515 = pneg %p179
        $region54: #{moe_layer.1} parent=35 // pred_check_branch
          %517 = sbr.rel (%p515) target = $region56
        $region55: #{moe_layer.1} parent=35 // pred_region
          %518 = dma.done [#allocation7], 128
        $region56: #{moe_layer.1} parent=35 // pred_fallthru
          _
      $region36: #{moe_layer.1} parent=5 // pred_fallthru
        _
      %p519 = scmp.le.s32.totalorder 2, %s23
      // Predicated region
      $region57: #{moe_layer.1} parent=5 // pred_check
        %p520 = pneg %p519
      $region58: #{moe_layer.1} parent=5 // pred_check_branch
        %522 = sbr.rel (%p520) target = $region60
      $region59: #{moe_layer.1} parent=5 // pred_region
        %s523 = ssub.s32 %s23, 2
      $region60: #{moe_layer.1} parent=5 // pred_fallthru
        _
    $region6: #{moe_layer.1} parent=1 // loop_footer
      %s27 = sadd.s32 1, %s23
    $region7: #{moe_layer.1} parent=1 // loop_footer_branch
      %22 = sbr.rel target = $region3
    $region8: #{moe_layer.1} parent=1 // loop_exit
      _
    %524 = vsyncpa [#allocation7], 1
    %s525 = scalar_lea.sflag [#allocation7], 1
    %526 = vsyncpa %s525, 1

</llo_original>
